<compile_context>
chip_gen: v5e
topology: v5e:2x2
jax: 0.10.0
libtpu: 0.0.40
codegen_flags: <defaults>
</compile_context>

<pallas_src>
import jax
import jax.numpy as jnp
from jax.experimental import pallas as pl
from jax.experimental.pallas import tpu as pltpu

_LANE = 128
_MIB = 1024 * 1024


def _round_up(x, m):
    return (x + m - 1) // m * m


def _glob_max_kernel(x_ref, o_ref):
    """x_ref: (TB, C, HW) VMEM block; o_ref: (TB, C) block."""
    hw = x_ref.shape[-1]
    if hw <= _LANE or hw % _LANE != 0:
        # HW fits in (or pads to) one lane group, or is lane-ragged: one reduce.
        o_ref[...] = jnp.max(x_ref[...], axis=-1)
    else:
        # Reduce each 128-lane chunk to (TB, C) right away and fold those so
        # the live accumulator stays tiny (review: never keep a (TB, C, 128)
        # accumulator alive across the chunk loop).
        acc = jnp.max(x_ref[:, :, pl.ds(0, _LANE)], axis=-1)
        for i in range(1, hw // _LANE):
            chunk_max = jnp.max(x_ref[:, :, pl.ds(i * _LANE, _LANE)], axis=-1)
            acc = jnp.maximum(acc, chunk_max)
        o_ref[...] = acc


def _hw_params():
    """(vmem_capacity_bytes, num_tensorcores) with conservative fallbacks."""
    vmem_cap = 128 * _MIB
    num_cores = 1
    try:
        info = pltpu.get_tpu_info()
        vmem_cap = int(getattr(info, "vmem_capacity_bytes", vmem_cap))
        num_cores = 0
        for attr in ("num_tensorcores", "tensorcore_count", "num_cores",
                     "core_count"):
            val = getattr(info, attr, None)
            if isinstance(val, int) and val > 0:
                num_cores = val
                break
        if num_cores <= 0:
            # Heuristic: v7x-class parts expose 64 MiB per-TC VMEM and have two
            # TensorCores; v5e/v6e expose 128 MiB and have one.
            num_cores = 2 if vmem_cap <= 96 * _MIB else 1
    except Exception:
        vmem_cap, num_cores = 64 * _MIB, 2  # safe on every generation
    return vmem_cap, num_cores


def glob_max_pool2d(x):
    """Pallas equivalent of GlobMaxPool2d.forward for NCHW input."""
    assert x.ndim == 4, x.shape
    B, C, H, W = x.shape
    # The PyTorch module implicitly requires these for .view(B, H*W).
    assert H == W, (H, W)
    assert C == H * W, (C, H, W)

    HW = H * W
    x3 = x.reshape(B, C, HW)            # metadata-only reshape (no HBM pass)
    itemsize = x.dtype.itemsize

    # --- per-image VMEM footprint, counting (sublane, 128-lane) tile padding.
    # Sub-32-bit dtypes pack along sublanes -> dtype-aware sublane rounding.
    sublane = {4: 8, 2: 16, 1: 32}.get(itemsize, 8)
    padded_in_per_img = _round_up(C, sublane) * _round_up(HW, _LANE) * itemsize
    useful_in_per_img = C * HW * itemsize
    padded_out_per_img = _round_up(C, _LANE) * itemsize
    inflation = padded_in_per_img / useful_in_per_img   # ~128/HW when HW < 128

    # --- per-generation block sizing by *useful* HBM bytes per grid step.
    vmem_cap, num_cores = _hw_params()
    if vmem_cap <= 96 * _MIB:        # v7x-class: fastest HBM, smallest (64 MiB) VMEM
        useful_target = 4 * _MIB     # >= ~4 MiB of real bytes per step
        per_buffer_cap = 7 * _MIB    # 2x(in+out) double-buffered stays ~16-20 MiB
        vmem_limit_cap = 48 * _MIB
    else:                            # v5e / v6e: 128 MiB VMEM
        useful_target = 8 * _MIB
        per_buffer_cap = 16 * _MIB
        vmem_limit_cap = 64 * _MIB

    per_buffer_budget = int(min(useful_target * inflation, per_buffer_cap))
    tb = max(1, per_buffer_budget // padded_in_per_img)
    # Keep >= num_cores grid steps only on multi-TensorCore parts (v7x) so the
    # batch axis shards across cores; on single-TC chips the clamp only adds
    # pipeline steps for zero parallelism benefit.
    if num_cores >= 2 and B >= 2:
        tb = min(tb, pl.cdiv(B, num_cores))
    if tb >= 8:
        tb = (tb // 8) * 8           # sublane-dense output blocks
    tb = int(min(tb, B))
    nb = int(pl.cdiv(B, tb))         # partial last block: OOB rows masked on store

    # Double-buffered input + output blocks, with headroom, capped per chip.
    vmem_needed = 2 * tb * (padded_in_per_img + padded_out_per_img)
    vmem_limit_bytes = int(min(vmem_limit_cap, max(16 * _MIB, 2 * vmem_needed)))

    cost = pl.CostEstimate(
        flops=0,                     # comparisons only; purely bandwidth-bound
        transcendentals=0,
        bytes_accessed=B * C * HW * itemsize + B * C * itemsize,
    )

    out = pl.pallas_call(
        _glob_max_kernel,
        out_shape=jax.ShapeDtypeStruct((B, C), x.dtype),
        grid_spec=pltpu.PrefetchScalarGridSpec(
            num_scalar_prefetch=0,
            grid=(nb,),
            in_specs=[pl.BlockSpec((tb, C, HW), lambda b: (b, 0, 0))],
            out_specs=pl.BlockSpec((tb, C), lambda b: (b, 0)),
        ),
        compiler_params=pltpu.CompilerParams(
            dimension_semantics=("parallel",),
            vmem_limit_bytes=vmem_limit_bytes,
        ),
        cost_estimate=cost,
    )(x3)

    # .view(B, H*W): since C == H*W this is a no-op reshape.
    return out.reshape(B, HW)


if __name__ == "__main__":
    key = jax.random.PRNGKey(0)

    def ref_glob_max(x):
        b, c, h, w = x.shape
        return jnp.max(x, axis=(2, 3)).reshape(b, h * w)

    # (B, H) cases:
    #  - (16, 4): batched, sublane-dense output blocks
    #  - (3, 4):  B % TB != 0 -> partial last block (masked store path)
    #  - (5, 8):  HW = 64 (2x padding inflation), odd batch
    #  - (2, 16): HW = 256 >= 128 -> chunk-reduce-then-fold path
    cases = [(16, 4), (3, 4), (5, 8), (2, 16)]
    for i, (B, H) in enumerate(cases):
        W = H
        C = H * W
        x = jax.random.normal(jax.random.fold_in(key, i),
                              (B, C, H, W), dtype=jnp.float32)
        y = jax.block_until_ready(glob_max_pool2d(x))
        ref = ref_glob_max(x)
        assert y.shape == (B, H * W), (y.shape, (B, H * W))
        assert jnp.allclose(y, ref), f"mismatch vs reference for case {i}"

    print("KERNEL_OK")
</pallas_src>

<mosaic_0001>
module attributes {stable_mosaic.version = 11 : i64} {
  func.func @_glob_max_kernel(%arg0: i32, %arg1: memref<8x16x16xf32, #tpu.memory_space<vmem>>, %arg2: memref<8x16xf32, #tpu.memory_space<vmem>>) attributes {dimension_semantics = [#tpu.dimension_semantics<parallel>], iteration_bounds = array<i64: 2>, scalar_prefetch = 0 : i64, scratch_operands = 0 : i64, tpu.core_type = #tpu.core_type<tc>, window_params = [{transform_indices = @transform_0, window_bounds = array<i64: 8, 16, 16>}, {transform_indices = @transform_1, window_bounds = array<i64: 8, 16>}]} {
    %c0 = arith.constant 0 : index
    %c0_0 = arith.constant 0 : index
    %c0_1 = arith.constant 0 : index
    %0 = vector.load %arg1[%c0, %c0_0, %c0_1] : memref<8x16x16xf32, #tpu.memory_space<vmem>>, vector<8x16x16xf32>
    %cst = arith.constant dense<0xFF800000> : vector<8x16xf32>
    %1 = vector.multi_reduction <maximumf>, %0, %cst [2] : vector<8x16x16xf32> to vector<8x16xf32>
    %c0_2 = arith.constant 0 : index
    %c0_3 = arith.constant 0 : index
    %2 = vector.load %arg2[%c0_2, %c0_3] : memref<8x16xf32, #tpu.memory_space<vmem>>, vector<8x16xf32>
    tpu.vector_store %arg2[%c0_2, %c0_3], %1 {strides = array<i32>} : memref<8x16xf32, #tpu.memory_space<vmem>>, vector<8x16xf32>,
    return
  }
  func.func @transform_0(%arg0: i32) -> (i32, i32, i32) {
    %c0_i32 = arith.constant 0 : i32
    %c0_i32_0 = arith.constant 0 : i32
    %c0_i32_1 = arith.constant 0 : i32
    return %arg0, %c0_i32, %c0_i32_0 : i32, i32, i32
  }
  func.func @transform_1(%arg0: i32) -> (i32, i32) {
    %c0_i32 = arith.constant 0 : i32
    %c0_i32_0 = arith.constant 0 : i32
    return %arg0, %c0_i32 : i32, i32
  }
}

</mosaic_0001>

<llo_original>
// kernel: tpu_custom_call.1
$region0: #{tpu_custom_call.1}
  #allocation0 [shape = 'u32[]', space=smem, size = 0x4, offset = 0x4, fixed_abs, tag = 'smem constant byte address 0x4 - core index']
  #allocation1 [shape = 'u32[72,128]{1,0:T(1,128)}', space=vmem, size = 0x9000, scoped, tag = 'internal scratch']
  %s0 = inlined_call_operand.hbm [shape: f32[16,16,16], index: 0, kind: input, shape index: {}]
  %s1 = inlined_call_operand.hbm [shape: f32[16,16], index: 1, kind: output, shape index: {}]
  %s2 = sld [smem:[#allocation0]]
  $region41: #{tpu_custom_call.1} parent=0
    _
  %s4 = ssub.s32 1, %s2
  %s5 = scalar_select 0, %s4, %s2
  $region1: #{tpu_custom_call.1} parent=0
    #allocation2 [shape = 'u8[131072]{0}', space=vmem, size = 0x20000, scoped, tag = 'input window, operand 0']
    #allocation3 [shape = 's32[2]{0}', space=sflag, size = 0x8, scoped, tag = 'scoped memory for tpu_custom_call.1']
    #allocation4 [shape = 's32[2]{0}', space=sflag, size = 0x8, scoped, tag = 'scoped memory for tpu_custom_call.1']
    #allocation5 [shape = 'u8[8192]{0}', space=vmem, size = 0x2000, scoped, tag = 'output window, operand 0']
    %6 = vsyncpa [#allocation3], 0
    %s7 = scalar_lea.sflag [#allocation3], 1
    %8 = vsyncpa %s7, 0
    %9 = vsyncpa [#allocation4], 0
    %s10 = scalar_lea.sflag [#allocation4], 1
    %11 = vsyncpa %s10, 0
    loop: start=0, step=1, limit=4
    $region2: #{tpu_custom_call.1} parent=1 // loop_pre_header
      _
    $region3: #{tpu_custom_call.1} parent=1 // loop_header
      %s13 = sphi 0, %s17
      %p14 = scmp.ge.s32.totalorder %s13, 4
      %s23 = sphi 0, %s25
      %s26 = sphi 0, %s23
      %s27 = sphi 0, %s26
      %s43 = sphi 0, %s27
      %s49 = sphi 0, %s51
      %s52 = sphi 0, %s49
      %s53 = sphi 0, %s52
      %s69 = sphi 0, %s53
    $region4: #{tpu_custom_call.1} parent=1 // loop_header_branch
      %16 = sbr.rel (%p14) target = $region8
    $region5: #{tpu_custom_call.1} parent=1 // loop_body
      %s18 = ssub.s32 %s13, 1
      %s19 = ssub.s32 %s13, 2
      %s20 = sadd.s32 %s13, 1
      %s21 = ssub.s32 %s13, %s20
      %p22 = scmp.eq.s32.totalorder %s21, 0
      %s24 = sadd.s32 %s23, 1
      %s25 = scalar_select %p22, %s23, %s24
      %p28 = pneg %p22
      %p29 = scmp.eq.s32.totalorder %s13, 1
      %p30 = por %p28, %p29
      %p31 = scmp.ne.s32.totalorder %s23, %s26
      %p32 = scmp.eq.s32.totalorder %s13, 0
      %p33 = por %p31, %p32
      %p34 = scmp.ne.s32.totalorder %s23, %s26
      %p35 = scmp.eq.s32.totalorder %s18, 1
      %p36 = por %p34, %p35
      %p37 = scmp.ne.s32.totalorder %s26, %s27
      %p38 = scmp.eq.s32.totalorder %s18, 0
      %p39 = por %p37, %p38
      %p40 = scmp.ne.s32.totalorder %s26, %s27
      %p41 = scmp.eq.s32.totalorder %s19, 1
      %p42 = por %p40, %p41
      %p44 = scmp.ne.s32.totalorder %s27, %s43
      %p45 = scmp.eq.s32.totalorder %s19, 0
      %p46 = por %p44, %p45
      %s47 = ssub.s32 %s13, %s20
      %p48 = scmp.eq.s32.totalorder %s47, 0
      %s50 = sadd.s32 %s49, 1
      %s51 = scalar_select %p48, %s49, %s50
      %p54 = pneg %p48
      %p55 = scmp.eq.s32.totalorder %s13, 1
      %p56 = por %p54, %p55
      %p57 = scmp.ne.s32.totalorder %s49, %s52
      %p58 = scmp.eq.s32.totalorder %s13, 0
      %p59 = por %p57, %p58
      %p60 = scmp.ne.s32.totalorder %s49, %s52
      %p61 = scmp.eq.s32.totalorder %s18, 1
      %p62 = por %p60, %p61
      %p63 = scmp.ne.s32.totalorder %s52, %s53
      %p64 = scmp.eq.s32.totalorder %s18, 0
      %p65 = por %p63, %p64
      %p66 = scmp.ne.s32.totalorder %s52, %s53
      %p67 = scmp.eq.s32.totalorder %s19, 1
      %p68 = por %p66, %p67
      %p70 = scmp.ne.s32.totalorder %s53, %s69
      %p71 = scmp.eq.s32.totalorder %s19, 0
      %p72 = por %p70, %p71
      %p73 = scmp.le.s32.totalorder 1, %s13
      %p74 = scmp.lt.s32.totalorder %s13, 3
      %p75 = pnand %p73, %p74
      %p76 = pneg %p75
      // Predicated region
      $region9: #{tpu_custom_call.1} parent=5 // pred_check
        _
      $region10: #{tpu_custom_call.1} parent=5 // pred_check_branch
        %78 = sbr.rel (%p75) target = $region12
      $region11: #{tpu_custom_call.1} parent=5 // pred_region
        %s79 = ssub.s32 %s13, 1
      $region12: #{tpu_custom_call.1} parent=5 // pred_fallthru
        _
      %p80 = scmp.lt.s32.totalorder %s13, 2
      // Predicated region
      $region13: #{tpu_custom_call.1} parent=5 // pred_check
        %p81 = pneg %p80
      $region14: #{tpu_custom_call.1} parent=5 // pred_check_branch
        %83 = sbr.rel (%p81) target = $region16
      $region15: #{tpu_custom_call.1} parent=5 // pred_region
        // Predicated region
        $region17: #{tpu_custom_call.1} parent=15 // pred_check
          %p84 = pneg %p33
        $region18: #{tpu_custom_call.1} parent=15 // pred_check_branch
          %86 = sbr.rel (%p84) target = $region20
        $region19: #{tpu_custom_call.1} parent=15 // pred_region
          %s87 = sand.u32 %s23, 1
          %s88 = scalar_lea.sflag [#allocation3], %s87
          %s89 = sand.u32 %s23, 1
          %s90 = smul.addr %s89, 128
          %s91 = scalar_lea.vmem [#allocation2], %s90
          %s92 = smul.u32 8, %s13
          %94 = vsyncadd %s88, 0
          %s95 = smul.addr %s92, 2
          %s96 = smul.addr %s95, 8
          %s97 = scalar_lea.hbm %s0, %s96
          %s98 = sshll.u32 %s97, 4
          %s99 = int_to_ptr.hbm [resolvable:$true] %s98
          %s100 = sshll.u32 %s91, 4
          %s101 = int_to_ptr.vmem [resolvable:$true] %s100
          %106 = dma.hbm_to_vmem [thread:$0]  %s99, 2048, %s101, %s88, 128, 128, 8
        $region20: #{tpu_custom_call.1} parent=15 // pred_fallthru
          _
      $region16: #{tpu_custom_call.1} parent=5 // pred_fallthru
        _
      %p107 = scmp.le.s32.totalorder 1, %s13
      %p108 = scmp.lt.s32.totalorder %s13, 3
      %p109 = pnand %p107, %p108
      %p110 = pneg %p109
      // Predicated region
      $region21: #{tpu_custom_call.1} parent=5 // pred_check
        _
      $region22: #{tpu_custom_call.1} parent=5 // pred_check_branch
        %112 = sbr.rel (%p109) target = $region24
      $region23: #{tpu_custom_call.1} parent=5 // pred_region
        %s113 = ssub.s32 %s13, 1
        %s114 = sand.u32 %s26, 1
        %s115 = scalar_lea.sflag [#allocation3], %s114
        %s116 = sand.u32 %s26, 1
        %s117 = smul.addr %s116, 128
        %s118 = scalar_lea.vmem [#allocation2], %s117
        // Predicated region
        $region25: #{tpu_custom_call.1} parent=23 // pred_check
          %p119 = pneg %p39
        $region26: #{tpu_custom_call.1} parent=23 // pred_check_branch
          %121 = sbr.rel (%p119) target = $region28
        $region27: #{tpu_custom_call.1} parent=23 // pred_region
          %123 = dma.done %s115, 2048
        $region28: #{tpu_custom_call.1} parent=23 // pred_fallthru
          _
        %s124 = sand.u32 %s26, 1
        %s125 = scalar_lea.sflag [#allocation3], %s124
        %s126 = sand.u32 %s26, 1
        %s127 = smul.addr %s126, 128
        %s128 = scalar_lea.vmem [#allocation2], %s127
        %p129 = pneg %p39
        %p130 = pneg %p36
        %p131 = pneg %p65
        %p132 = pneg %p62
        %s133 = sand.u32 %s52, 1
        %s134 = scalar_lea.sflag [#allocation4], %s133
        %s135 = sand.u32 %s52, 1
        %s136 = smul.addr %s135, 8
        %s137 = scalar_lea.vmem [#allocation5], %s136
        %s138 = smul.u32 8, %s18
        %v139 = vld [vmem:[%s118] sm:$0xff]
        %v140 = vld [vmem:[%s118 + $0x8] sm:$0xff]
        %v141 = vld [vmem:[%s118 + $0x10] sm:$0xff]
        %v142 = vld [vmem:[%s118 + $0x18] sm:$0xff]
        %v143 = vld [vmem:[%s118 + $0x20] sm:$0xff]
        %v144 = vld [vmem:[%s118 + $0x28] sm:$0xff]
        %v145 = vld [vmem:[%s118 + $0x30] sm:$0xff]
        %v146 = vld [vmem:[%s118 + $0x38] sm:$0xff]
        %v147 = vld [vmem:[%s118 + $0x40] sm:$0xff]
        %v148 = vld [vmem:[%s118 + $0x48] sm:$0xff]
        %v149 = vld [vmem:[%s118 + $0x50] sm:$0xff]
        %v150 = vld [vmem:[%s118 + $0x58] sm:$0xff]
        %v151 = vld [vmem:[%s118 + $0x60] sm:$0xff]
        %v152 = vld [vmem:[%s118 + $0x68] sm:$0xff]
        %v153 = vld [vmem:[%s118 + $0x70] sm:$0xff]
        %v154 = vld [vmem:[%s118 + $0x78] sm:$0xff]
        %vm155 = vcmask 130048
        %v156 = vsel %vm155, %v139, -inf
        %157 = vmax.xlane.f32.xlu0 %v156
        %v158 = vpop.xlane.xlu0 %157
        %v159 = vsel %vm155, %v140, -inf
        %160 = vmax.xlane.f32.xlu0 %v159
        %v161 = vpop.xlane.xlu0 %160
        %v162 = vsel %vm155, %v141, -inf
        %163 = vmax.xlane.f32.xlu0 %v162
        %v164 = vpop.xlane.xlu0 %163
        %v165 = vsel %vm155, %v142, -inf
        %166 = vmax.xlane.f32.xlu0 %v165
        %v167 = vpop.xlane.xlu0 %166
        %v168 = vsel %vm155, %v143, -inf
        %169 = vmax.xlane.f32.xlu0 %v168
        %v170 = vpop.xlane.xlu0 %169
        %v171 = vsel %vm155, %v144, -inf
        %172 = vmax.xlane.f32.xlu0 %v171
        %v173 = vpop.xlane.xlu0 %172
        %v174 = vsel %vm155, %v145, -inf
        %175 = vmax.xlane.f32.xlu0 %v174
        %v176 = vpop.xlane.xlu0 %175
        %v177 = vsel %vm155, %v146, -inf
        %178 = vmax.xlane.f32.xlu0 %v177
        %v179 = vpop.xlane.xlu0 %178
        %v180 = vsel %vm155, %v147, -inf
        %181 = vmax.xlane.f32.xlu0 %v180
        %v182 = vpop.xlane.xlu0 %181
        %v183 = vsel %vm155, %v148, -inf
        %184 = vmax.xlane.f32.xlu0 %v183
        %v185 = vpop.xlane.xlu0 %184
        %v186 = vsel %vm155, %v149, -inf
        %187 = vmax.xlane.f32.xlu0 %v186
        %v188 = vpop.xlane.xlu0 %187
        %v189 = vsel %vm155, %v150, -inf
        %190 = vmax.xlane.f32.xlu0 %v189
        %v191 = vpop.xlane.xlu0 %190
        %v192 = vsel %vm155, %v151, -inf
        %193 = vmax.xlane.f32.xlu0 %v192
        %v194 = vpop.xlane.xlu0 %193
        %v195 = vsel %vm155, %v152, -inf
        %196 = vmax.xlane.f32.xlu0 %v195
        %v197 = vpop.xlane.xlu0 %196
        %v198 = vsel %vm155, %v153, -inf
        %199 = vmax.xlane.f32.xlu0 %v198
        %v200 = vpop.xlane.xlu0 %199
        %v201 = vsel %vm155, %v154, -inf
        %202 = vmax.xlane.f32.xlu0 %v201
        %v203 = vpop.xlane.xlu0 %202
        %v220 = vlaneseq
        %v221 = vand.u32 %v220, 127
        %v222 = vperm.slane %v158, %v221
        %v223 = vadd.s32 %v221, 4294967288
        %v224 = vperm.slane %v161, %v223
        %vm225 = vcmask 130112
        %v226 = vsel %vm225, %v224, %v222
        %v227 = vperm.slane %v164, %v221
        %v228 = vperm.slane %v167, %v223
        %v229 = vsel %vm225, %v228, %v227
        %v230 = vperm.slane %v170, %v221
        %v231 = vperm.slane %v173, %v223
        %v232 = vsel %vm225, %v231, %v230
        %v233 = vperm.slane %v176, %v221
        %v234 = vperm.slane %v179, %v223
        %v235 = vsel %vm225, %v234, %v233
        %v236 = vperm.slane %v182, %v221
        %v237 = vperm.slane %v185, %v223
        %v238 = vsel %vm225, %v237, %v236
        %v239 = vperm.slane %v188, %v221
        %v240 = vperm.slane %v191, %v223
        %v241 = vsel %vm225, %v240, %v239
        %v242 = vperm.slane %v194, %v221
        %v243 = vperm.slane %v197, %v223
        %v244 = vsel %vm225, %v243, %v242
        %v245 = vperm.slane %v200, %v221
        %v246 = vperm.slane %v203, %v223
        %v247 = vsel %vm225, %v246, %v245
        %vm248 = vcmask 1041409
        %v249 = vsel %vm248, %v229, %v226
        %vm250 = vcmask 1042434
        %v251 = vsel %vm250, %v232, %v249
        %vm252 = vcmask 1043459
        %v253 = vsel %vm252, %v235, %v251
        %vm254 = vcmask 1044484
        %v255 = vsel %vm254, %v238, %v253
        %vm256 = vcmask 1045509
        %v257 = vsel %vm256, %v241, %v255
        %vm258 = vcmask 1046534
        %v259 = vsel %vm258, %v244, %v257
        %vm260 = vcmask 1047559
        %v261 = vsel %vm260, %v247, %v259
        %263 = vst.msk [vmem:[%s137] sm:$0xff] %vm155, %v261
        %s264 = sand.u32 %s52, 1
        %s265 = scalar_lea.sflag [#allocation4], %s264
        %s266 = sand.u32 %s52, 1
        %s267 = smul.addr %s266, 8
        %s268 = scalar_lea.vmem [#allocation5], %s267
        // Predicated region
        $region29: #{tpu_custom_call.1} parent=23 // pred_check
          %p269 = pneg %p62
        $region30: #{tpu_custom_call.1} parent=23 // pred_check_branch
          %271 = sbr.rel (%p269) target = $region32
        $region31: #{tpu_custom_call.1} parent=23 // pred_region
          %273 = vsyncadd %s265, 0
          %s274 = smul.addr %s18, 8
          %s275 = scalar_lea.hbm %s1, %s274
          %s277 = sshll.u32 %s268, 4
          %s278 = int_to_ptr.vmem [resolvable:$true] %s277
          %s279 = sshll.u32 %s275, 4
          %s280 = int_to_ptr.hbm [resolvable:$true] %s279
          %282 = dma.vmem_to_hbm [thread:$0]  %s278, 128, %s280, %s265
        $region32: #{tpu_custom_call.1} parent=23 // pred_fallthru
          _
      $region24: #{tpu_custom_call.1} parent=5 // pred_fallthru
        _
      %p283 = scmp.le.s32.totalorder 2, %s13
      // Predicated region
      $region33: #{tpu_custom_call.1} parent=5 // pred_check
        %p284 = pneg %p283
      $region34: #{tpu_custom_call.1} parent=5 // pred_check_branch
        %286 = sbr.rel (%p284) target = $region36
      $region35: #{tpu_custom_call.1} parent=5 // pred_region
        %s287 = ssub.s32 %s13, 2
        // Predicated region
        $region37: #{tpu_custom_call.1} parent=35 // pred_check
          %p288 = pneg %p68
        $region38: #{tpu_custom_call.1} parent=35 // pred_check_branch
          %290 = sbr.rel (%p288) target = $region40
        $region39: #{tpu_custom_call.1} parent=35 // pred_region
          %s291 = sand.u32 %s53, 1
          %s292 = scalar_lea.sflag [#allocation4], %s291
          %s293 = sand.u32 %s53, 1
          %s294 = smul.addr %s293, 8
          %s295 = scalar_lea.vmem [#allocation5], %s294
          %297 = dma.done %s292, 128
        $region40: #{tpu_custom_call.1} parent=35 // pred_fallthru
          _
      $region36: #{tpu_custom_call.1} parent=5 // pred_fallthru
        _
    $region6: #{tpu_custom_call.1} parent=1 // loop_footer
      %s17 = sadd.s32 1, %s13
    $region7: #{tpu_custom_call.1} parent=1 // loop_footer_branch
      %12 = sbr.rel target = $region3
    $region8: #{tpu_custom_call.1} parent=1 // loop_exit
      _
    %298 = vsyncpa [#allocation3], 1
    %s299 = scalar_lea.sflag [#allocation3], 1
    %300 = vsyncpa %s299, 1
    %301 = vsyncpa [#allocation4], 1
    %s302 = scalar_lea.sflag [#allocation4], 1
    %303 = vsyncpa %s302, 1

</llo_original>
